<compile_context>
chip_gen: v5e
topology: v5e:2x2
jax: 0.10.0
libtpu: 0.0.40
codegen_flags: <defaults>
</compile_context>

<pallas_src>
import functools

import jax
import jax.numpy as jnp
from jax.experimental import pallas as pl
from jax.experimental.pallas import tpu as pltpu

_MiB = 1024 * 1024


def _round_up(n, m):
    return (n + m - 1) // m * m


def _padded_tile_bytes(sub, lane, itemsize):
    # VMEM footprint of a 2D tile: sublane dim pads to 8, lane dim to 128.
    return _round_up(max(int(sub), 1), 8) * _round_up(max(int(lane), 1), 128) * itemsize


def _vmem_budget_bytes():
    """Generation-aware scoped-VMEM budget (leave ~25% headroom for Mosaic scratch)."""
    cap = None
    try:
        cap = getattr(pltpu.get_tpu_info(), "vmem_capacity_bytes", None)
    except Exception:
        cap = None
    if not cap:
        cap = 64 * _MiB                       # conservative fallback = v7x physical VMEM
    return int(min(cap - cap // 4, 100 * _MiB))   # ~48 MiB on v7x, ~96 MiB on v5e/v6e


def _weights_vmem_bytes(C, H, w_item):
    # w1t (C, H) and w2t (H, C), double-buffered by the pipeline.
    return 2 * (_padded_tile_bytes(C, H, w_item) + _padded_tile_bytes(H, C, w_item))


def _pick_b_blk(B, per_row_bytes, avail_bytes, *, lane_flat):
    """Batch-block size: as big as VMEM allows, but keep the parallel axis populated."""
    by_vmem = max(1, avail_bytes // max(1, 6 * per_row_bytes))   # 4x dbuf + ~2x temps
    b_blk = min(B, by_vmem)
    if B >= 2:
        b_blk = min(b_blk, pl.cdiv(B, 2))     # >=2 grid steps: feed both v7x TensorCores
        cand = pl.cdiv(B, 8)                  # prefer ~8 steps while blocks stay >= 1 MiB
        if cand * per_row_bytes >= _MiB:
            b_blk = min(b_blk, cand)
    if lane_flat and b_blk != B:
        # Flat layout puts the batch dim second-to-last: block dim must be a multiple
        # of 8 (or the full batch) to satisfy TPU (8, 128) tiling rules.
        b_blk = (b_blk // 8) * 8
        if b_blk < 8:
            b_blk = min(B, 8)
        if b_blk >= B:
            b_blk = B
    return max(1, int(b_blk))


# --------------------------------------------------------------- fused, lane-dense flat
def _se_fused_flat_kernel(x_ref, pool_ref, bcast_ref, w1t_ref, w2t_ref, o_ref, *, inv_l):
    x = x_ref[...]                                                # (Bblk, C*L), x.dtype
    # squeeze: per-channel sums via a one-hot pooling matmul (f32 acc, no relayout of x)
    mean = jnp.dot(x, pool_ref[...],
                   preferred_element_type=jnp.float32) * inv_l    # (Bblk, C) f32
    # excite: tiny FCs; weights fed in their native dtype (bf16-friendly MXU)
    h = jnp.maximum(jnp.dot(mean.astype(w1t_ref.dtype), w1t_ref[...],
                            preferred_element_type=jnp.float32), 0.0)       # (Bblk, H)
    s = jax.nn.sigmoid(jnp.dot(h.astype(w2t_ref.dtype), w2t_ref[...],
                               preferred_element_type=jnp.float32))         # (Bblk, C)
    # broadcast gate back to the flat lane layout with a one-hot matmul, rescale in x.dtype
    gate = jnp.dot(s.astype(x.dtype), bcast_ref[...])            # (Bblk, C*L), x.dtype
    o_ref[...] = x * gate


def _se_fused_flat(x, w1, w2, b_blk, budget, donate_x):
    B, C, L = x.shape
    H = w1.shape[0]
    dt = x.dtype
    itemsize = dt.itemsize
    x_flat = x.reshape(B, C * L)
    eye = jnp.eye(C, dtype=dt)
    pool = jnp.repeat(eye, L, axis=0)          # (C*L, C): pool[c*L + l, c] = 1
    bcast = jnp.repeat(eye, L, axis=1)         # (C, C*L): bcast[c, c*L + l] = 1

    blk = _round_up(b_blk, 8) * _round_up(C * L, 128) * itemsize
    pool_vmem = 2 * (_padded_tile_bytes(C * L, C, itemsize)
                     + _padded_tile_bytes(C, C * L, itemsize))
    vmem = min(budget, 6 * blk + pool_vmem
               + _weights_vmem_bytes(C, H, w1.dtype.itemsize) + 2 * _MiB)

    out = pl.pallas_call(
        functools.partial(_se_fused_flat_kernel, inv_l=1.0 / L),
        out_shape=jax.ShapeDtypeStruct((B, C * L), dt),
        grid=(pl.cdiv(B, b_blk),),
        in_specs=[
            pl.BlockSpec((b_blk, C * L), lambda b: (b, 0)),
            pl.BlockSpec((C * L, C), lambda b: (0, 0)),
            pl.BlockSpec((C, C * L), lambda b: (0, 0)),
            pl.BlockSpec((C, H), lambda b: (0, 0)),
            pl.BlockSpec((H, C), lambda b: (0, 0)),
        ],
        out_specs=pl.BlockSpec((b_blk, C * L), lambda b: (b, 0)),
        compiler_params=pltpu.CompilerParams(
            dimension_semantics=("parallel",),
            vmem_limit_bytes=int(max(8 * _MiB, vmem)),
        ),
        input_output_aliases={0: 0} if donate_x else {},
    )(x_flat, pool, bcast, jnp.transpose(w1), jnp.transpose(w2))
    return out.reshape(B, C, L)


# --------------------------------------------------------------- fused, structured (L >= 128)
def _se_fused_kernel(x_ref, w1t_ref, w2t_ref, o_ref, *, inv_l):
    x = x_ref[...]                                                # (Bblk, C, L), x.dtype
    mean = jnp.sum(x, axis=2, dtype=jnp.float32) * inv_l          # f32 accumulation only
    h = jnp.maximum(jnp.dot(mean.astype(w1t_ref.dtype), w1t_ref[...],
                            preferred_element_type=jnp.float32), 0.0)
    s = jax.nn.sigmoid(jnp.dot(h.astype(w2t_ref.dtype), w2t_ref[...],
                               preferred_element_type=jnp.float32))        # (Bblk, C) f32
    o_ref[...] = x * s.astype(x.dtype)[:, :, None]                # rescale in x.dtype


def _se_fused(x, w1, w2, b_blk, budget, donate_x):
    B, C, L = x.shape
    H = w1.shape[0]
    dt = x.dtype
    blk = b_blk * _padded_tile_bytes(C, L, dt.itemsize)
    vmem = min(budget, 6 * blk + _weights_vmem_bytes(C, H, w1.dtype.itemsize) + 2 * _MiB)
    return pl.pallas_call(
        functools.partial(_se_fused_kernel, inv_l=1.0 / L),
        out_shape=jax.ShapeDtypeStruct((B, C, L), dt),
        grid=(pl.cdiv(B, b_blk),),
        in_specs=[
            pl.BlockSpec((b_blk, C, L), lambda b: (b, 0, 0)),
            pl.BlockSpec((C, H), lambda b: (0, 0)),
            pl.BlockSpec((H, C), lambda b: (0, 0)),
        ],
        out_specs=pl.BlockSpec((b_blk, C, L), lambda b: (b, 0, 0)),
        compiler_params=pltpu.CompilerParams(
            dimension_semantics=("parallel",),
            vmem_limit_bytes=int(max(8 * _MiB, vmem)),
        ),
        input_output_aliases={0: 0} if donate_x else {},
    )(x, jnp.transpose(w1), jnp.transpose(w2))


# --------------------------------------------------------------- two-pass tiled path
def _se_sum_kernel(x_ref, sum_ref, *, seq_len, l_tile):
    l = pl.program_id(1)

    @pl.when(l == 0)
    def _():
        sum_ref[...] = jnp.zeros_like(sum_ref)

    x = x_ref[0]                                                  # (C, l_tile), x.dtype
    rem = seq_len % l_tile
    if rem == 0:
        # every tile is full: no masking work on the hot path
        sum_ref[0] += jnp.sum(x, axis=1, keepdims=True, dtype=jnp.float32)
    else:
        last = pl.num_programs(1) - 1

        @pl.when(l != last)
        def _():
            sum_ref[0] += jnp.sum(x, axis=1, keepdims=True, dtype=jnp.float32)

        @pl.when(l == last)
        def _():
            # mask only the padded tail of the final partial tile
            col = jax.lax.broadcasted_iota(jnp.int32, x.shape, 1)
            xm = jnp.where(col < rem, x, jnp.zeros_like(x))
            sum_ref[0] += jnp.sum(xm, axis=1, keepdims=True, dtype=jnp.float32)


def _se_rescale_kernel(x_ref, s_ref, o_ref):
    o_ref[0] = x_ref[0] * s_ref[0]            # (C, l_tile) * (C, 1), all in x.dtype


def _se_tiled(x, w1, w2, budget, l_tile, donate_x):
    B, C, L = x.shape
    dt = x.dtype
    itemsize = dt.itemsize

    if l_tile is None:
        # budget-driven tile: in+out double-buffered (4x) + ~2x temporaries
        target = max(_MiB, (budget - 4 * _MiB) // 6)
        l_tile = (target // (_round_up(C, 8) * itemsize)) // 128 * 128
        l_tile = max(128, int(l_tile))
    l_tile = int(min(l_tile, L))
    assert l_tile == L or l_tile % 128 == 0, (
        "l_tile must cover L or be a multiple of 128 (lane-aligned blocks)")
    n_l = pl.cdiv(L, l_tile)
    blk = _padded_tile_bytes(C, l_tile, itemsize)

    # pass 1: per-(b, c) f32 sums. Output block stays resident across the inner l loop
    # (constant index_map, l innermost/"arbitrary") and is used as the accumulator.
    # No FC / weights in this kernel (no N=1 matvecs on the reduction-critical path).
    sums = pl.pallas_call(
        functools.partial(_se_sum_kernel, seq_len=L, l_tile=l_tile),
        out_shape=jax.ShapeDtypeStruct((B, C, 1), jnp.float32),
        grid=(B, n_l),
        in_specs=[pl.BlockSpec((1, C, l_tile), lambda b, l: (b, 0, l))],
        out_specs=pl.BlockSpec((1, C, 1), lambda b, l: (b, 0, 0)),
        compiler_params=pltpu.CompilerParams(
            dimension_semantics=("parallel", "arbitrary"),
            vmem_limit_bytes=int(max(8 * _MiB, min(budget, 4 * blk + 2 * _MiB))),
        ),
    )(x)

    # excite (tiny, batched): relu/sigmoid FC stack on (B, C) means in plain XLA.
    mean = sums[:, :, 0] * jnp.float32(1.0 / L)                   # (B, C) f32
    h = jnp.maximum(jnp.dot(mean, w1.T.astype(jnp.float32),
                            preferred_element_type=jnp.float32), 0.0)
    gate = jax.nn.sigmoid(jnp.dot(h, w2.T.astype(jnp.float32),
                                  preferred_element_type=jnp.float32))
    gate = gate.astype(dt).reshape(B, C, 1)

    # pass 2: lane-dense L-tiled rescale in x.dtype, both grid axes parallel.
    return pl.pallas_call(
        _se_rescale_kernel,
        out_shape=jax.ShapeDtypeStruct((B, C, L), dt),
        grid=(B, n_l),
        in_specs=[
            pl.BlockSpec((1, C, l_tile), lambda b, l: (b, 0, l)),
            pl.BlockSpec((1, C, 1), lambda b, l: (b, 0, 0)),
        ],
        out_specs=pl.BlockSpec((1, C, l_tile), lambda b, l: (b, 0, l)),
        compiler_params=pltpu.CompilerParams(
            dimension_semantics=("parallel", "parallel"),
            vmem_limit_bytes=int(max(8 * _MiB, min(budget, 6 * blk + 2 * _MiB))),
        ),
        input_output_aliases={0: 0} if donate_x else {},
    )(x, gate)


# --------------------------------------------------------------- entry point
def se_layer(x, w1, w2, *, donate_x=False, force_tiled=False, l_tile=None):
    """Squeeze-and-excitation forward.

    x : (B, C, L)  activations (NCL, same layout as the PyTorch module)
    w1: (H, C)     nn.Linear(C, C//r, bias=False).weight
    w2: (C, H)     nn.Linear(C//r, C, bias=False).weight
    donate_x: alias x to the output (only if the caller no longer needs x).
    """
    B, C, L = x.shape
    H = w1.shape[0]
    itemsize = x.dtype.itemsize
    budget = _vmem_budget_bytes()
    w_vmem = _weights_vmem_bytes(C, H, w1.dtype.itemsize)

    if not force_tiled:
        if L < 128:
            # lane-dense flattened fused path (avoid ~128/L lane-padding waste)
            pool_vmem = 2 * (_padded_tile_bytes(C * L, C, itemsize)
                             + _padded_tile_bytes(C, C * L, itemsize))
            row_flat = _round_up(C * L, 128) * itemsize
            avail = budget - w_vmem - pool_vmem - 2 * _MiB
            if pool_vmem <= 16 * _MiB and avail >= 48 * row_flat:
                b_blk = _pick_b_blk(B, row_flat, avail, lane_flat=True)
                return _se_fused_flat(x, w1, w2, b_blk, budget, donate_x)
        # structured fused path: single pass over x (2x HBM traffic vs 3x for two-pass)
        row_struct = _padded_tile_bytes(C, L, itemsize)
        avail = budget - w_vmem - 2 * _MiB
        if avail >= 6 * row_struct:
            b_blk = _pick_b_blk(B, row_struct, avail, lane_flat=False)
            return _se_fused(x, w1, w2, b_blk, budget, donate_x)

    # slab too large for a fused block (or forced): two-pass L-tiled path.
    return _se_tiled(x, w1, w2, budget, l_tile, donate_x)


def se_layer_ref(x, w1, w2):
    # pure-JAX reference of the PyTorch forward
    y = jnp.mean(x.astype(jnp.float32), axis=2)           # (B, C)
    y = jnp.maximum(y @ w1.T.astype(jnp.float32), 0.0)    # (B, H)
    y = jax.nn.sigmoid(y @ w2.T.astype(jnp.float32))      # (B, C)
    return (x * y[:, :, None]).astype(x.dtype)


if __name__ == "__main__":
    key = jax.random.PRNGKey(0)
    kx, k1, k2, kx2, kx3 = jax.random.split(key, 5)

    B, C, reduction = 2, 64, 16
    H = C // reduction
    # nn.Linear weights: (out_features, in_features), bias=False
    w1 = jax.random.normal(k1, (H, C), dtype=jnp.float32) * 0.1
    w2 = jax.random.normal(k2, (C, H), dtype=jnp.float32) * 0.1

    # 1) small-L fused path (lane-dense flattened blocks + MXU one-hot pooling)
    x = jax.random.normal(kx, (B, C, 16), dtype=jnp.float32)
    out = jax.block_until_ready(se_layer(x, w1, w2))
    assert jnp.allclose(out, se_layer_ref(x, w1, w2), atol=1e-5, rtol=1e-5)

    # 2) L >= 128 fused path (structured blocks, f32-accumulated in-kernel reduction)
    x3 = jax.random.normal(kx3, (B, C, 256), dtype=jnp.float32)
    out3 = jax.block_until_ready(se_layer(x3, w1, w2))
    assert jnp.allclose(out3, se_layer_ref(x3, w1, w2), atol=1e-5, rtol=1e-5)

    # 3) two-pass tiled path, including a masked partial final L tile
    x2 = jax.random.normal(kx2, (B, C, 160), dtype=jnp.float32)
    out2 = jax.block_until_ready(se_layer(x2, w1, w2, force_tiled=True, l_tile=128))
    assert jnp.allclose(out2, se_layer_ref(x2, w1, w2), atol=1e-5, rtol=1e-5)

    print("KERNEL_OK")
</pallas_src>

<mosaic_0001>
module attributes {stable_mosaic.version = 11 : i64} {
  func.func @_se_fused_flat_kernel(%arg0: i32, %arg1: memref<2x1024xf32, #tpu.memory_space<vmem>>, %arg2: memref<1024x64xf32, #tpu.memory_space<vmem>>, %arg3: memref<64x1024xf32, #tpu.memory_space<vmem>>, %arg4: memref<64x4xf32, #tpu.memory_space<vmem>>, %arg5: memref<4x64xf32, #tpu.memory_space<vmem>>, %arg6: memref<2x1024xf32, #tpu.memory_space<vmem>>) attributes {dimension_semantics = [#tpu.dimension_semantics<parallel>], iteration_bounds = array<i64: 1>, scalar_prefetch = 0 : i64, scratch_operands = 0 : i64, tpu.core_type = #tpu.core_type<tc>, window_params = [{transform_indices = @transform_0, window_bounds = array<i64: 2, 1024>}, {pipeline_mode = #tpu.pipeline_mode<synchronous>, transform_indices = @transform_1, window_bounds = array<i64: 1024, 64>}, {pipeline_mode = #tpu.pipeline_mode<synchronous>, transform_indices = @transform_2, window_bounds = array<i64: 64, 1024>}, {pipeline_mode = #tpu.pipeline_mode<synchronous>, transform_indices = @transform_3, window_bounds = array<i64: 64, 4>}, {pipeline_mode = #tpu.pipeline_mode<synchronous>, transform_indices = @transform_4, window_bounds = array<i64: 4, 64>}, {transform_indices = @transform_5, window_bounds = array<i64: 2, 1024>}]} {
    %c0 = arith.constant 0 : index
    %c0_0 = arith.constant 0 : index
    %0 = vector.load %arg1[%c0, %c0_0] : memref<2x1024xf32, #tpu.memory_space<vmem>>, vector<2x1024xf32>
    %c0_1 = arith.constant 0 : index
    %c0_2 = arith.constant 0 : index
    %1 = vector.load %arg2[%c0_1, %c0_2] : memref<1024x64xf32, #tpu.memory_space<vmem>>, vector<1024x64xf32>
    %cst = arith.constant dense<0.000000e+00> : vector<2x64xf32>
    %2 = tpu.matmul %0, %1, %cst {dimension_numbers = #tpu.dot_dimension_numbers<[1], [0], [0], [1], [0, 0, 1, 1], [], []>} : vector<2x1024xf32>, vector<1024x64xf32>, vector<2x64xf32> -> vector<2x64xf32>
    %cst_3 = arith.constant 6.250000e-02 : f32
    %3 = vector.broadcast %cst_3 : f32 to vector<2x64xf32>
    %4 = arith.mulf %2, %3 : vector<2x64xf32>
    %c0_4 = arith.constant 0 : index
    %c0_5 = arith.constant 0 : index
    %5 = vector.load %arg4[%c0_4, %c0_5] : memref<64x4xf32, #tpu.memory_space<vmem>>, vector<64x4xf32>
    %cst_6 = arith.constant dense<0.000000e+00> : vector<2x4xf32>
    %6 = tpu.matmul %4, %5, %cst_6 {dimension_numbers = #tpu.dot_dimension_numbers<[1], [0], [0], [1], [0, 0, 1, 1], [], []>} : vector<2x64xf32>, vector<64x4xf32>, vector<2x4xf32> -> vector<2x4xf32>
    %cst_7 = arith.constant 0.000000e+00 : f32
    %7 = vector.broadcast %cst_7 : f32 to vector<2x4xf32>
    %8 = arith.maximumf %6, %7 : vector<2x4xf32>
    %c0_8 = arith.constant 0 : index
    %c0_9 = arith.constant 0 : index
    %9 = vector.load %arg5[%c0_8, %c0_9] : memref<4x64xf32, #tpu.memory_space<vmem>>, vector<4x64xf32>
    %cst_10 = arith.constant dense<0.000000e+00> : vector<2x64xf32>
    %10 = tpu.matmul %8, %9, %cst_10 {dimension_numbers = #tpu.dot_dimension_numbers<[1], [0], [0], [1], [0, 0, 1, 1], [], []>} : vector<2x4xf32>, vector<4x64xf32>, vector<2x64xf32> -> vector<2x64xf32>
    %11 = arith.negf %10 : vector<2x64xf32>
    %12 = math.exp %11 : vector<2x64xf32>
    %cst_11 = arith.constant 1.000000e+00 : f32
    %13 = vector.broadcast %cst_11 : f32 to vector<2x64xf32>
    %14 = arith.addf %13, %12 : vector<2x64xf32>
    %15 = arith.divf %13, %14 : vector<2x64xf32>
    %c0_12 = arith.constant 0 : index
    %c0_13 = arith.constant 0 : index
    %16 = vector.load %arg3[%c0_12, %c0_13] : memref<64x1024xf32, #tpu.memory_space<vmem>>, vector<64x1024xf32>
    %cst_14 = arith.constant dense<0.000000e+00> : vector<2x1024xf32>
    %17 = tpu.matmul %15, %16, %cst_14 {dimension_numbers = #tpu.dot_dimension_numbers<[1], [0], [0], [1], [0, 0, 1, 1], [], []>} : vector<2x64xf32>, vector<64x1024xf32>, vector<2x1024xf32> -> vector<2x1024xf32>
    %18 = arith.mulf %0, %17 : vector<2x1024xf32>
    %c0_15 = arith.constant 0 : index
    %c0_16 = arith.constant 0 : index
    %19 = vector.load %arg6[%c0_15, %c0_16] : memref<2x1024xf32, #tpu.memory_space<vmem>>, vector<2x1024xf32>
    tpu.vector_store %arg6[%c0_15, %c0_16], %18 {strides = array<i32>} : memref<2x1024xf32, #tpu.memory_space<vmem>>, vector<2x1024xf32>,
    return
  }
  func.func @transform_0(%arg0: i32) -> (i32, i32) {
    %c0_i32 = arith.constant 0 : i32
    %c0_i32_0 = arith.constant 0 : i32
    return %arg0, %c0_i32 : i32, i32
  }
  func.func @transform_1(%arg0: i32) -> (i32, i32) {
    %c0_i32 = arith.constant 0 : i32
    %c0_i32_0 = arith.constant 0 : i32
    %c0_i32_1 = arith.constant 0 : i32
    return %c0_i32, %c0_i32_0 : i32, i32
  }
  func.func @transform_2(%arg0: i32) -> (i32, i32) {
    %c0_i32 = arith.constant 0 : i32
    %c0_i32_0 = arith.constant 0 : i32
    %c0_i32_1 = arith.constant 0 : i32
    return %c0_i32, %c0_i32_0 : i32, i32
  }
  func.func @transform_3(%arg0: i32) -> (i32, i32) {
    %c0_i32 = arith.constant 0 : i32
    %c0_i32_0 = arith.constant 0 : i32
    %c0_i32_1 = arith.constant 0 : i32
    return %c0_i32, %c0_i32_0 : i32, i32
  }
  func.func @transform_4(%arg0: i32) -> (i32, i32) {
    %c0_i32 = arith.constant 0 : i32
    %c0_i32_0 = arith.constant 0 : i32
    %c0_i32_1 = arith.constant 0 : i32
    return %c0_i32, %c0_i32_0 : i32, i32
  }
  func.func @transform_5(%arg0: i32) -> (i32, i32) {
    %c0_i32 = arith.constant 0 : i32
    %c0_i32_0 = arith.constant 0 : i32
    return %arg0, %c0_i32 : i32, i32
  }
}

</mosaic_0001>

<llo_original>
// kernel: tpu_custom_call.1
$region0: #{tpu_custom_call.1}
  #allocation0 [shape = 'u32[]', space=smem, size = 0x4, offset = 0x4, fixed_abs, tag = 'smem constant byte address 0x4 - core index']
  #allocation1 [shape = 'u32[72,128]{1,0:T(1,128)}', space=vmem, size = 0x9000, scoped, tag = 'internal scratch']
  %s0 = inlined_call_operand.vmem [shape: f32[2,1024], index: 0, kind: input, shape index: {}]
  %s1 = inlined_call_operand.vmem [shape: f32[1024,64], index: 1, kind: input, shape index: {}]
  %s2 = inlined_call_operand.vmem [shape: f32[64,1024], index: 2, kind: input, shape index: {}]
  %s3 = inlined_call_operand.vmem [shape: f32[64,4], index: 3, kind: input, shape index: {}]
  %s4 = inlined_call_operand.vmem [shape: f32[4,64], index: 4, kind: input, shape index: {}]
  %s5 = inlined_call_operand.hbm [shape: f32[2,1024], index: 5, kind: output, shape index: {}]
  %s6 = sld [smem:[#allocation0]]
  $region30: #{tpu_custom_call.1} parent=0
    _
  %s8 = ssub.s32 1, %s6
  %s9 = scalar_select 0, %s8, %s6
  $region1: #{tpu_custom_call.1} parent=0
    #allocation2 [shape = 'u8[8192]{0}', space=vmem, size = 0x2000, scoped, tag = 'output window, operand 0, single buffered']
    #allocation3 [shape = 's32[1]{0}', space=sflag, size = 0x4, scoped, tag = 'scoped memory for tpu_custom_call.1']
    %10 = vsyncpa [#allocation3], 0
    // Predicated region
    $region2: #{tpu_custom_call.1} parent=1 // pred_check
      _
    $region3: #{tpu_custom_call.1} parent=1 // pred_check_branch
      %12 = sbr.rel (0) target = $region5
    $region4: #{tpu_custom_call.1} parent=1 // pred_region
      _
    $region5: #{tpu_custom_call.1} parent=1 // pred_fallthru
      _
    // Predicated region
    $region6: #{tpu_custom_call.1} parent=1 // pred_check
      _
    $region7: #{tpu_custom_call.1} parent=1 // pred_check_branch
      %14 = sbr.rel (0) target = $region9
    $region8: #{tpu_custom_call.1} parent=1 // pred_region
      _
    $region9: #{tpu_custom_call.1} parent=1 // pred_fallthru
      _
    // Predicated region
    $region10: #{tpu_custom_call.1} parent=1 // pred_check
      _
    $region11: #{tpu_custom_call.1} parent=1 // pred_check_branch
      %16 = sbr.rel (0) target = $region13
    $region12: #{tpu_custom_call.1} parent=1 // pred_region
      _
    $region13: #{tpu_custom_call.1} parent=1 // pred_fallthru
      _
    // Predicated region
    $region14: #{tpu_custom_call.1} parent=1 // pred_check
      _
    $region15: #{tpu_custom_call.1} parent=1 // pred_check_branch
      %18 = sbr.rel (0) target = $region17
    $region16: #{tpu_custom_call.1} parent=1 // pred_region
      _
    $region17: #{tpu_custom_call.1} parent=1 // pred_fallthru
      _
    // Predicated region
    $region18: #{tpu_custom_call.1} parent=1 // pred_check
      _
    $region19: #{tpu_custom_call.1} parent=1 // pred_check_branch
      %20 = sbr.rel (0) target = $region21
    $region20: #{tpu_custom_call.1} parent=1 // pred_region
      _
    $region21: #{tpu_custom_call.1} parent=1 // pred_fallthru
      _
    %v21 = vld [vmem:[%s0] sm:$0xff]
    %v22 = vld [vmem:[%s0 + $0x8] sm:$0xff]
    %v23 = vld [vmem:[%s1] sm:$0xff]
    %v24 = vld [vmem:[%s1 + $0x8] sm:$0xff]
    %v25 = vld [vmem:[%s1 + $0x10] sm:$0xff]
    %v26 = vld [vmem:[%s1 + $0x18] sm:$0xff]
    %v27 = vld [vmem:[%s1 + $0x20] sm:$0xff]
    %v28 = vld [vmem:[%s1 + $0x28] sm:$0xff]
    %v29 = vld [vmem:[%s1 + $0x30] sm:$0xff]
    %v30 = vld [vmem:[%s1 + $0x38] sm:$0xff]
    %v31 = vld [vmem:[%s1 + $0x40] sm:$0xff]
    %v32 = vld [vmem:[%s1 + $0x48] sm:$0xff]
    %v33 = vld [vmem:[%s1 + $0x50] sm:$0xff]
    %v34 = vld [vmem:[%s1 + $0x58] sm:$0xff]
    %v35 = vld [vmem:[%s1 + $0x60] sm:$0xff]
    %v36 = vld [vmem:[%s1 + $0x68] sm:$0xff]
    %v37 = vld [vmem:[%s1 + $0x70] sm:$0xff]
    %v38 = vld [vmem:[%s1 + $0x78] sm:$0xff]
    %v39 = vld [vmem:[%s1 + $0x80] sm:$0xff]
    %v40 = vld [vmem:[%s1 + $0x88] sm:$0xff]
    %v41 = vld [vmem:[%s1 + $0x90] sm:$0xff]
    %v42 = vld [vmem:[%s1 + $0x98] sm:$0xff]
    %v43 = vld [vmem:[%s1 + $0xa0] sm:$0xff]
    %v44 = vld [vmem:[%s1 + $0xa8] sm:$0xff]
    %v45 = vld [vmem:[%s1 + $0xb0] sm:$0xff]
    %v46 = vld [vmem:[%s1 + $0xb8] sm:$0xff]
    %v47 = vld [vmem:[%s1 + $0xc0] sm:$0xff]
    %v48 = vld [vmem:[%s1 + $0xc8] sm:$0xff]
    %v49 = vld [vmem:[%s1 + $0xd0] sm:$0xff]
    %v50 = vld [vmem:[%s1 + $0xd8] sm:$0xff]
    %v51 = vld [vmem:[%s1 + $0xe0] sm:$0xff]
    %v52 = vld [vmem:[%s1 + $0xe8] sm:$0xff]
    %v53 = vld [vmem:[%s1 + $0xf0] sm:$0xff]
    %v54 = vld [vmem:[%s1 + $0xf8] sm:$0xff]
    %v55 = vld [vmem:[%s1 + $0x100] sm:$0xff]
    %v56 = vld [vmem:[%s1 + $0x108] sm:$0xff]
    %v57 = vld [vmem:[%s1 + $0x110] sm:$0xff]
    %v58 = vld [vmem:[%s1 + $0x118] sm:$0xff]
    %v59 = vld [vmem:[%s1 + $0x120] sm:$0xff]
    %v60 = vld [vmem:[%s1 + $0x128] sm:$0xff]
    %v61 = vld [vmem:[%s1 + $0x130] sm:$0xff]
    %v62 = vld [vmem:[%s1 + $0x138] sm:$0xff]
    %v63 = vld [vmem:[%s1 + $0x140] sm:$0xff]
    %v64 = vld [vmem:[%s1 + $0x148] sm:$0xff]
    %v65 = vld [vmem:[%s1 + $0x150] sm:$0xff]
    %v66 = vld [vmem:[%s1 + $0x158] sm:$0xff]
    %v67 = vld [vmem:[%s1 + $0x160] sm:$0xff]
    %v68 = vld [vmem:[%s1 + $0x168] sm:$0xff]
    %v69 = vld [vmem:[%s1 + $0x170] sm:$0xff]
    %v70 = vld [vmem:[%s1 + $0x178] sm:$0xff]
    %v71 = vld [vmem:[%s1 + $0x180] sm:$0xff]
    %v72 = vld [vmem:[%s1 + $0x188] sm:$0xff]
    %v73 = vld [vmem:[%s1 + $0x190] sm:$0xff]
    %v74 = vld [vmem:[%s1 + $0x198] sm:$0xff]
    %v75 = vld [vmem:[%s1 + $0x1a0] sm:$0xff]
    %v76 = vld [vmem:[%s1 + $0x1a8] sm:$0xff]
    %v77 = vld [vmem:[%s1 + $0x1b0] sm:$0xff]
    %v78 = vld [vmem:[%s1 + $0x1b8] sm:$0xff]
    %v79 = vld [vmem:[%s1 + $0x1c0] sm:$0xff]
    %v80 = vld [vmem:[%s1 + $0x1c8] sm:$0xff]
    %v81 = vld [vmem:[%s1 + $0x1d0] sm:$0xff]
    %v82 = vld [vmem:[%s1 + $0x1d8] sm:$0xff]
    %v83 = vld [vmem:[%s1 + $0x1e0] sm:$0xff]
    %v84 = vld [vmem:[%s1 + $0x1e8] sm:$0xff]
    %v85 = vld [vmem:[%s1 + $0x1f0] sm:$0xff]
    %v86 = vld [vmem:[%s1 + $0x1f8] sm:$0xff]
    %v87 = vld [vmem:[%s1 + $0x200] sm:$0xff]
    %v88 = vld [vmem:[%s1 + $0x208] sm:$0xff]
    %v89 = vld [vmem:[%s1 + $0x210] sm:$0xff]
    %v90 = vld [vmem:[%s1 + $0x218] sm:$0xff]
    %v91 = vld [vmem:[%s1 + $0x220] sm:$0xff]
    %v92 = vld [vmem:[%s1 + $0x228] sm:$0xff]
    %v93 = vld [vmem:[%s1 + $0x230] sm:$0xff]
    %v94 = vld [vmem:[%s1 + $0x238] sm:$0xff]
    %v95 = vld [vmem:[%s1 + $0x240] sm:$0xff]
    %v96 = vld [vmem:[%s1 + $0x248] sm:$0xff]
    %v97 = vld [vmem:[%s1 + $0x250] sm:$0xff]
    %v98 = vld [vmem:[%s1 + $0x258] sm:$0xff]
    %v99 = vld [vmem:[%s1 + $0x260] sm:$0xff]
    %v100 = vld [vmem:[%s1 + $0x268] sm:$0xff]
    %v101 = vld [vmem:[%s1 + $0x270] sm:$0xff]
    %v102 = vld [vmem:[%s1 + $0x278] sm:$0xff]
    %v103 = vld [vmem:[%s1 + $0x280] sm:$0xff]
    %v104 = vld [vmem:[%s1 + $0x288] sm:$0xff]
    %v105 = vld [vmem:[%s1 + $0x290] sm:$0xff]
    %v106 = vld [vmem:[%s1 + $0x298] sm:$0xff]
    %v107 = vld [vmem:[%s1 + $0x2a0] sm:$0xff]
    %v108 = vld [vmem:[%s1 + $0x2a8] sm:$0xff]
    %v109 = vld [vmem:[%s1 + $0x2b0] sm:$0xff]
    %v110 = vld [vmem:[%s1 + $0x2b8] sm:$0xff]
    %v111 = vld [vmem:[%s1 + $0x2c0] sm:$0xff]
    %v112 = vld [vmem:[%s1 + $0x2c8] sm:$0xff]
    %v113 = vld [vmem:[%s1 + $0x2d0] sm:$0xff]
    %v114 = vld [vmem:[%s1 + $0x2d8] sm:$0xff]
    %v115 = vld [vmem:[%s1 + $0x2e0] sm:$0xff]
    %v116 = vld [vmem:[%s1 + $0x2e8] sm:$0xff]
    %v117 = vld [vmem:[%s1 + $0x2f0] sm:$0xff]
    %v118 = vld [vmem:[%s1 + $0x2f8] sm:$0xff]
    %v119 = vld [vmem:[%s1 + $0x300] sm:$0xff]
    %v120 = vld [vmem:[%s1 + $0x308] sm:$0xff]
    %v121 = vld [vmem:[%s1 + $0x310] sm:$0xff]
    %v122 = vld [vmem:[%s1 + $0x318] sm:$0xff]
    %v123 = vld [vmem:[%s1 + $0x320] sm:$0xff]
    %v124 = vld [vmem:[%s1 + $0x328] sm:$0xff]
    %v125 = vld [vmem:[%s1 + $0x330] sm:$0xff]
    %v126 = vld [vmem:[%s1 + $0x338] sm:$0xff]
    %v127 = vld [vmem:[%s1 + $0x340] sm:$0xff]
    %v128 = vld [vmem:[%s1 + $0x348] sm:$0xff]
    %v129 = vld [vmem:[%s1 + $0x350] sm:$0xff]
    %v130 = vld [vmem:[%s1 + $0x358] sm:$0xff]
    %v131 = vld [vmem:[%s1 + $0x360] sm:$0xff]
    %v132 = vld [vmem:[%s1 + $0x368] sm:$0xff]
    %v133 = vld [vmem:[%s1 + $0x370] sm:$0xff]
    %v134 = vld [vmem:[%s1 + $0x378] sm:$0xff]
    %v135 = vld [vmem:[%s1 + $0x380] sm:$0xff]
    %v136 = vld [vmem:[%s1 + $0x388] sm:$0xff]
    %v137 = vld [vmem:[%s1 + $0x390] sm:$0xff]
    %v138 = vld [vmem:[%s1 + $0x398] sm:$0xff]
    %v139 = vld [vmem:[%s1 + $0x3a0] sm:$0xff]
    %v140 = vld [vmem:[%s1 + $0x3a8] sm:$0xff]
    %v141 = vld [vmem:[%s1 + $0x3b0] sm:$0xff]
    %v142 = vld [vmem:[%s1 + $0x3b8] sm:$0xff]
    %v143 = vld [vmem:[%s1 + $0x3c0] sm:$0xff]
    %v144 = vld [vmem:[%s1 + $0x3c8] sm:$0xff]
    %v145 = vld [vmem:[%s1 + $0x3d0] sm:$0xff]
    %v146 = vld [vmem:[%s1 + $0x3d8] sm:$0xff]
    %v147 = vld [vmem:[%s1 + $0x3e0] sm:$0xff]
    %v148 = vld [vmem:[%s1 + $0x3e8] sm:$0xff]
    %v149 = vld [vmem:[%s1 + $0x3f0] sm:$0xff]
    %v150 = vld [vmem:[%s1 + $0x3f8] sm:$0xff]
    %153 = vst [vmem:[#allocation1] ss:$4 sm:$0xff] %v21
    %s154 = scalar_lea.vmem [#allocation1], 32
    %155 = vst [vmem:[%s154] ss:$4 sm:$0xff] %v22
    %v156 = vld.sshfl [vmem:[#allocation1] sm:$0xff pattern:$0x73625140]
    %v157 = vld.sshfl [vmem:[#allocation1 + $0x8] sm:$0xff pattern:$0x73625140]
    %v158 = vld.sshfl [vmem:[#allocation1 + $0x10] sm:$0xff pattern:$0x73625140]
    %v159 = vld.sshfl [vmem:[#allocation1 + $0x18] sm:$0xff pattern:$0x73625140]
    %v160 = vld.sshfl [vmem:[#allocation1 + $0x20] sm:$0xff pattern:$0x73625140]
    %v161 = vld.sshfl [vmem:[#allocation1 + $0x28] sm:$0xff pattern:$0x73625140]
    %v162 = vld.sshfl [vmem:[#allocation1 + $0x30] sm:$0xff pattern:$0x73625140]
    %v163 = vld.sshfl [vmem:[#allocation1 + $0x38] sm:$0xff pattern:$0x73625140]
    %172 = vmatpush.msra.mxu0 %v38
    %173 = vmatpush.msra.mxu0 %v37
    %174 = vmatpush.msra.mxu0 %v36
    %175 = vmatpush.msra.mxu0 %v35
    %176 = vmatpush.msra.mxu0 %v34
    %177 = vmatpush.msra.mxu0 %v33
    %178 = vmatpush.msra.mxu0 %v32
    %179 = vmatpush.msra.mxu0 %v31
    %180 = vmatpush.msra.mxu0 %v30
    %181 = vmatpush.msra.mxu0 %v29
    %182 = vmatpush.msra.mxu0 %v28
    %183 = vmatpush.msra.mxu0 %v27
    %184 = vmatpush.msra.mxu0 %v26
    %185 = vmatpush.msra.mxu0 %v25
    %186 = vmatpush.msra.mxu0 %v24
    %187 = vmatpush.msra.mxu0 %v23
    %188 = vmatmul.f32.gmra.mxu0 %v156
    %v189 = vpop.f32.mrf.mxu0
    %v190 = vadd.f32 0.0, %v189
    %191 = vdwg.mxu0
    %192 = vmatpush.msra.mxu0 %v54
    %193 = vmatpush.msra.mxu0 %v53
    %194 = vmatpush.msra.mxu0 %v52
    %195 = vmatpush.msra.mxu0 %v51
    %196 = vmatpush.msra.mxu0 %v50
    %197 = vmatpush.msra.mxu0 %v49
    %198 = vmatpush.msra.mxu0 %v48
    %199 = vmatpush.msra.mxu0 %v47
    %200 = vmatpush.msra.mxu0 %v46
    %201 = vmatpush.msra.mxu0 %v45
    %202 = vmatpush.msra.mxu0 %v44
    %203 = vmatpush.msra.mxu0 %v43
    %204 = vmatpush.msra.mxu0 %v42
    %205 = vmatpush.msra.mxu0 %v41
    %206 = vmatpush.msra.mxu0 %v40
    %207 = vmatpush.msra.mxu0 %v39
    %208 = vmatmul.f32.gmra.mxu0 %v157
    %v209 = vpop.f32.mrf.mxu0
    %v210 = vadd.f32 %v190, %v209
    %211 = vdwg.mxu0
    %212 = vmatpush.msra.mxu0 %v70
    %213 = vmatpush.msra.mxu0 %v69
    %214 = vmatpush.msra.mxu0 %v68
    %215 = vmatpush.msra.mxu0 %v67
    %216 = vmatpush.msra.mxu0 %v66
    %217 = vmatpush.msra.mxu0 %v65
    %218 = vmatpush.msra.mxu0 %v64
    %219 = vmatpush.msra.mxu0 %v63
    %220 = vmatpush.msra.mxu0 %v62
    %221 = vmatpush.msra.mxu0 %v61
    %222 = vmatpush.msra.mxu0 %v60
    %223 = vmatpush.msra.mxu0 %v59
    %224 = vmatpush.msra.mxu0 %v58
    %225 = vmatpush.msra.mxu0 %v57
    %226 = vmatpush.msra.mxu0 %v56
    %227 = vmatpush.msra.mxu0 %v55
    %228 = vmatmul.f32.gmra.mxu0 %v158
    %v229 = vpop.f32.mrf.mxu0
    %v230 = vadd.f32 %v210, %v229
    %231 = vdwg.mxu0
    %232 = vmatpush.msra.mxu0 %v86
    %233 = vmatpush.msra.mxu0 %v85
    %234 = vmatpush.msra.mxu0 %v84
    %235 = vmatpush.msra.mxu0 %v83
    %236 = vmatpush.msra.mxu0 %v82
    %237 = vmatpush.msra.mxu0 %v81
    %238 = vmatpush.msra.mxu0 %v80
    %239 = vmatpush.msra.mxu0 %v79
    %240 = vmatpush.msra.mxu0 %v78
    %241 = vmatpush.msra.mxu0 %v77
    %242 = vmatpush.msra.mxu0 %v76
    %243 = vmatpush.msra.mxu0 %v75
    %244 = vmatpush.msra.mxu0 %v74
    %245 = vmatpush.msra.mxu0 %v73
    %246 = vmatpush.msra.mxu0 %v72
    %247 = vmatpush.msra.mxu0 %v71
    %248 = vmatmul.f32.gmra.mxu0 %v159
    %v249 = vpop.f32.mrf.mxu0
    %v250 = vadd.f32 %v230, %v249
    %251 = vdwg.mxu0
    %252 = vmatpush.msra.mxu0 %v102
    %253 = vmatpush.msra.mxu0 %v101
    %254 = vmatpush.msra.mxu0 %v100
    %255 = vmatpush.msra.mxu0 %v99
    %256 = vmatpush.msra.mxu0 %v98
    %257 = vmatpush.msra.mxu0 %v97
    %258 = vmatpush.msra.mxu0 %v96
    %259 = vmatpush.msra.mxu0 %v95
    %260 = vmatpush.msra.mxu0 %v94
    %261 = vmatpush.msra.mxu0 %v93
    %262 = vmatpush.msra.mxu0 %v92
    %263 = vmatpush.msra.mxu0 %v91
    %264 = vmatpush.msra.mxu0 %v90
    %265 = vmatpush.msra.mxu0 %v89
    %266 = vmatpush.msra.mxu0 %v88
    %267 = vmatpush.msra.mxu0 %v87
    %268 = vmatmul.f32.gmra.mxu0 %v160
    %v269 = vpop.f32.mrf.mxu0
    %v270 = vadd.f32 %v250, %v269
    %271 = vdwg.mxu0
    %272 = vmatpush.msra.mxu0 %v118
    %273 = vmatpush.msra.mxu0 %v117
    %274 = vmatpush.msra.mxu0 %v116
    %275 = vmatpush.msra.mxu0 %v115
    %276 = vmatpush.msra.mxu0 %v114
    %277 = vmatpush.msra.mxu0 %v113
    %278 = vmatpush.msra.mxu0 %v112
    %279 = vmatpush.msra.mxu0 %v111
    %280 = vmatpush.msra.mxu0 %v110
    %281 = vmatpush.msra.mxu0 %v109
    %282 = vmatpush.msra.mxu0 %v108
    %283 = vmatpush.msra.mxu0 %v107
    %284 = vmatpush.msra.mxu0 %v106
    %285 = vmatpush.msra.mxu0 %v105
    %286 = vmatpush.msra.mxu0 %v104
    %287 = vmatpush.msra.mxu0 %v103
    %288 = vmatmul.f32.gmra.mxu0 %v161
    %v289 = vpop.f32.mrf.mxu0
    %v290 = vadd.f32 %v270, %v289
    %291 = vdwg.mxu0
    %292 = vmatpush.msra.mxu0 %v134
    %293 = vmatpush.msra.mxu0 %v133
    %294 = vmatpush.msra.mxu0 %v132
    %295 = vmatpush.msra.mxu0 %v131
    %296 = vmatpush.msra.mxu0 %v130
    %297 = vmatpush.msra.mxu0 %v129
    %298 = vmatpush.msra.mxu0 %v128
    %299 = vmatpush.msra.mxu0 %v127
    %300 = vmatpush.msra.mxu0 %v126
    %301 = vmatpush.msra.mxu0 %v125
    %302 = vmatpush.msra.mxu0 %v124
    %303 = vmatpush.msra.mxu0 %v123
    %304 = vmatpush.msra.mxu0 %v122
    %305 = vmatpush.msra.mxu0 %v121
    %306 = vmatpush.msra.mxu0 %v120
    %307 = vmatpush.msra.mxu0 %v119
    %308 = vmatmul.f32.gmra.mxu0 %v162
    %v309 = vpop.f32.mrf.mxu0
    %v310 = vadd.f32 %v290, %v309
    %311 = vdwg.mxu0
    %312 = vmatpush.msra.mxu0 %v150
    %313 = vmatpush.msra.mxu0 %v149
    %314 = vmatpush.msra.mxu0 %v148
    %315 = vmatpush.msra.mxu0 %v147
    %316 = vmatpush.msra.mxu0 %v146
    %317 = vmatpush.msra.mxu0 %v145
    %318 = vmatpush.msra.mxu0 %v144
    %319 = vmatpush.msra.mxu0 %v143
    %320 = vmatpush.msra.mxu0 %v142
    %321 = vmatpush.msra.mxu0 %v141
    %322 = vmatpush.msra.mxu0 %v140
    %323 = vmatpush.msra.mxu0 %v139
    %324 = vmatpush.msra.mxu0 %v138
    %325 = vmatpush.msra.mxu0 %v137
    %326 = vmatpush.msra.mxu0 %v136
    %327 = vmatpush.msra.mxu0 %v135
    %328 = vmatmul.f32.gmra.mxu0 %v163
    %v329 = vpop.f32.mrf.mxu0
    %v330 = vadd.f32 %v310, %v329
    %331 = vdwg.mxu0
    %v332 = vmul.f32 %v330, 0.0625
    %v333 = vld [vmem:[%s3] sm:$0xff]
    %v334 = vld [vmem:[%s3 + $0x8] sm:$0xff]
    %v335 = vld [vmem:[%s3 + $0x10] sm:$0xff]
    %v336 = vld [vmem:[%s3 + $0x18] sm:$0xff]
    %v337 = vld [vmem:[%s3 + $0x20] sm:$0xff]
    %v338 = vld [vmem:[%s3 + $0x28] sm:$0xff]
    %v339 = vld [vmem:[%s3 + $0x30] sm:$0xff]
    %v340 = vld [vmem:[%s3 + $0x38] sm:$0xff]
    %vm341 = vcmask 523264
    %v343 = vsel %vm341, %v332, 0
    %345 = vmatpush.msra.mxu0 0.0
    %346 = vmatpush.msra.mxu0 0.0
    %347 = vmatpush.msra.mxu0 0.0
    %348 = vmatpush.msra.mxu0 0.0
    %349 = vmatpush.msra.mxu0 0.0
    %350 = vmatpush.msra.mxu0 0.0
    %351 = vmatpush.msra.mxu0 0.0
    %352 = vmatpush.msra.mxu0 0.0
    %353 = vmatpush.msra.mxu0 %v340
    %354 = vmatpush.msra.mxu0 %v339
    %355 = vmatpush.msra.mxu0 %v338
    %356 = vmatpush.msra.mxu0 %v337
    %357 = vmatpush.msra.mxu0 %v336
    %358 = vmatpush.msra.mxu0 %v335
    %359 = vmatpush.msra.mxu0 %v334
    %360 = vmatpush.msra.mxu0 %v333
    %361 = vmatmul.f32.gmra.mxu0 %v343
    %v362 = vpop.f32.mrf.mxu0
    %v363 = vadd.f32 0.0, %v362
    %364 = vdwg.mxu0
    %v365 = vmax.f32 %v363, 0.0
    %v366 = vld [vmem:[%s4] sm:$0xf]
    %vm367 = vcmask 31744
    %v369 = vsel %vm367, %v365, 0
    %vm371 = vcmask 1043456
    %v373 = vsel %vm371, %v366, 0
    %375 = vmatpush.msra.mxu0 0.0
    %376 = vmatpush.msra.mxu0 0.0
    %377 = vmatpush.msra.mxu0 0.0
    %378 = vmatpush.msra.mxu0 0.0
    %379 = vmatpush.msra.mxu0 0.0
    %380 = vmatpush.msra.mxu0 0.0
    %381 = vmatpush.msra.mxu0 0.0
    %382 = vmatpush.msra.mxu0 0.0
    %383 = vmatpush.msra.mxu0 0.0
    %384 = vmatpush.msra.mxu0 0.0
    %385 = vmatpush.msra.mxu0 0.0
    %386 = vmatpush.msra.mxu0 0.0
    %387 = vmatpush.msra.mxu0 0.0
    %388 = vmatpush.msra.mxu0 0.0
    %389 = vmatpush.msra.mxu0 0.0
    %390 = vmatpush.msra.mxu0 %v373
    %391 = vmatmul.f32.gmra.mxu0 %v369
    %v392 = vpop.f32.mrf.mxu0
    %v393 = vadd.f32 0.0, %v392
    %394 = vdwg.mxu0
    %v395 = vxor.u32 %v393, 2147483648
    %v396 = vmul.f32 %v395, 1.442695
    %v397 = vpow.pop %v396
    %v398 = vadd.f32 %v397, 1.0
    %v399 = vrcp.pop %v398
    %v400 = vmul.f32 %v398, %v399
    %v401 = vsub.f32 1.0, %v400
    %v402 = vmul.f32 %v399, %v401
    %v403 = vadd.f32 %v399, %v402
    %vm404 = vweird.f32 %v398
    %vm405 = vweird.f32 %v399
    %vm406 = vmor %vm404, %vm405
    %v407 = vsel %vm406, %v399, %v403
    %v408 = vand.u32 2147483647, %v398
    %vm409 = vcmp.eq.f32.partialorder %v408, 8.507059e+37
    %v410 = vand.u32 %v398, 2147483648
    %v411 = vor.u32 1.1754944e-38, %v410
    %v412 = vsel %vm409, %v411, %v407
    %v413 = vmul.f32 1.0, %v412
    %v414 = vld [vmem:[%s2] sm:$0xff]
    %v415 = vld [vmem:[%s2 + $0x8] sm:$0xff]
    %v416 = vld [vmem:[%s2 + $0x10] sm:$0xff]
    %v417 = vld [vmem:[%s2 + $0x18] sm:$0xff]
    %v418 = vld [vmem:[%s2 + $0x20] sm:$0xff]
    %v419 = vld [vmem:[%s2 + $0x28] sm:$0xff]
    %v420 = vld [vmem:[%s2 + $0x30] sm:$0xff]
    %v421 = vld [vmem:[%s2 + $0x38] sm:$0xff]
    %v422 = vld [vmem:[%s2 + $0x40] sm:$0xff]
    %v423 = vld [vmem:[%s2 + $0x48] sm:$0xff]
    %v424 = vld [vmem:[%s2 + $0x50] sm:$0xff]
    %v425 = vld [vmem:[%s2 + $0x58] sm:$0xff]
    %v426 = vld [vmem:[%s2 + $0x60] sm:$0xff]
    %v427 = vld [vmem:[%s2 + $0x68] sm:$0xff]
    %v428 = vld [vmem:[%s2 + $0x70] sm:$0xff]
    %v429 = vld [vmem:[%s2 + $0x78] sm:$0xff]
    %v430 = vld [vmem:[%s2 + $0x80] sm:$0xff]
    %v431 = vld [vmem:[%s2 + $0x88] sm:$0xff]
    %v432 = vld [vmem:[%s2 + $0x90] sm:$0xff]
    %v433 = vld [vmem:[%s2 + $0x98] sm:$0xff]
    %v434 = vld [vmem:[%s2 + $0xa0] sm:$0xff]
    %v435 = vld [vmem:[%s2 + $0xa8] sm:$0xff]
    %v436 = vld [vmem:[%s2 + $0xb0] sm:$0xff]
    %v437 = vld [vmem:[%s2 + $0xb8] sm:$0xff]
    %v438 = vld [vmem:[%s2 + $0xc0] sm:$0xff]
    %v439 = vld [vmem:[%s2 + $0xc8] sm:$0xff]
    %v440 = vld [vmem:[%s2 + $0xd0] sm:$0xff]
    %v441 = vld [vmem:[%s2 + $0xd8] sm:$0xff]
    %v442 = vld [vmem:[%s2 + $0xe0] sm:$0xff]
    %v443 = vld [vmem:[%s2 + $0xe8] sm:$0xff]
    %v444 = vld [vmem:[%s2 + $0xf0] sm:$0xff]
    %v445 = vld [vmem:[%s2 + $0xf8] sm:$0xff]
    %v446 = vld [vmem:[%s2 + $0x100] sm:$0xff]
    %v447 = vld [vmem:[%s2 + $0x108] sm:$0xff]
    %v448 = vld [vmem:[%s2 + $0x110] sm:$0xff]
    %v449 = vld [vmem:[%s2 + $0x118] sm:$0xff]
    %v450 = vld [vmem:[%s2 + $0x120] sm:$0xff]
    %v451 = vld [vmem:[%s2 + $0x128] sm:$0xff]
    %v452 = vld [vmem:[%s2 + $0x130] sm:$0xff]
    %v453 = vld [vmem:[%s2 + $0x138] sm:$0xff]
    %v454 = vld [vmem:[%s2 + $0x140] sm:$0xff]
    %v455 = vld [vmem:[%s2 + $0x148] sm:$0xff]
    %v456 = vld [vmem:[%s2 + $0x150] sm:$0xff]
    %v457 = vld [vmem:[%s2 + $0x158] sm:$0xff]
    %v458 = vld [vmem:[%s2 + $0x160] sm:$0xff]
    %v459 = vld [vmem:[%s2 + $0x168] sm:$0xff]
    %v460 = vld [vmem:[%s2 + $0x170] sm:$0xff]
    %v461 = vld [vmem:[%s2 + $0x178] sm:$0xff]
    %v462 = vld [vmem:[%s2 + $0x180] sm:$0xff]
    %v463 = vld [vmem:[%s2 + $0x188] sm:$0xff]
    %v464 = vld [vmem:[%s2 + $0x190] sm:$0xff]
    %v465 = vld [vmem:[%s2 + $0x198] sm:$0xff]
    %v466 = vld [vmem:[%s2 + $0x1a0] sm:$0xff]
    %v467 = vld [vmem:[%s2 + $0x1a8] sm:$0xff]
    %v468 = vld [vmem:[%s2 + $0x1b0] sm:$0xff]
    %v469 = vld [vmem:[%s2 + $0x1b8] sm:$0xff]
    %v470 = vld [vmem:[%s2 + $0x1c0] sm:$0xff]
    %v471 = vld [vmem:[%s2 + $0x1c8] sm:$0xff]
    %v472 = vld [vmem:[%s2 + $0x1d0] sm:$0xff]
    %v473 = vld [vmem:[%s2 + $0x1d8] sm:$0xff]
    %v474 = vld [vmem:[%s2 + $0x1e0] sm:$0xff]
    %v475 = vld [vmem:[%s2 + $0x1e8] sm:$0xff]
    %v476 = vld [vmem:[%s2 + $0x1f0] sm:$0xff]
    %v477 = vld [vmem:[%s2 + $0x1f8] sm:$0xff]
    %v479 = vsel %vm341, %v413, 0
    %481 = vmatpush.msra.mxu0 0.0
    %482 = vmatpush.msra.mxu0 0.0
    %483 = vmatpush.msra.mxu0 0.0
    %484 = vmatpush.msra.mxu0 0.0
    %485 = vmatpush.msra.mxu0 0.0
    %486 = vmatpush.msra.mxu0 0.0
    %487 = vmatpush.msra.mxu0 0.0
    %488 = vmatpush.msra.mxu0 0.0
    %489 = vmatpush.msra.mxu0 %v470
    %490 = vmatpush.msra.mxu0 %v462
    %491 = vmatpush.msra.mxu0 %v454
    %492 = vmatpush.msra.mxu0 %v446
    %493 = vmatpush.msra.mxu0 %v438
    %494 = vmatpush.msra.mxu0 %v430
    %495 = vmatpush.msra.mxu0 %v422
    %496 = vmatpush.msra.mxu0 %v414
    %497 = vmatmul.f32.gmra.mxu0 %v479
    %v498 = vpop.f32.mrf.mxu0
    %v499 = vadd.f32 0.0, %v498
    %500 = vdwg.mxu0
    %501 = vmatpush.msra.mxu0 0.0
    %502 = vmatpush.msra.mxu0 0.0
    %503 = vmatpush.msra.mxu0 0.0
    %504 = vmatpush.msra.mxu0 0.0
    %505 = vmatpush.msra.mxu0 0.0
    %506 = vmatpush.msra.mxu0 0.0
    %507 = vmatpush.msra.mxu0 0.0
    %508 = vmatpush.msra.mxu0 0.0
    %509 = vmatpush.msra.mxu0 %v471
    %510 = vmatpush.msra.mxu0 %v463
    %511 = vmatpush.msra.mxu0 %v455
    %512 = vmatpush.msra.mxu0 %v447
    %513 = vmatpush.msra.mxu0 %v439
    %514 = vmatpush.msra.mxu0 %v431
    %515 = vmatpush.msra.mxu0 %v423
    %516 = vmatpush.msra.mxu0 %v415
    %517 = vmatmul.f32.gmra.mxu0 %v479
    %v518 = vpop.f32.mrf.mxu0
    %v519 = vadd.f32 0.0, %v518
    %520 = vdwg.mxu0
    %521 = vmatpush.msra.mxu0 0.0
    %522 = vmatpush.msra.mxu0 0.0
    %523 = vmatpush.msra.mxu0 0.0
    %524 = vmatpush.msra.mxu0 0.0
    %525 = vmatpush.msra.mxu0 0.0
    %526 = vmatpush.msra.mxu0 0.0
    %527 = vmatpush.msra.mxu0 0.0
    %528 = vmatpush.msra.mxu0 0.0
    %529 = vmatpush.msra.mxu0 %v472
    %530 = vmatpush.msra.mxu0 %v464
    %531 = vmatpush.msra.mxu0 %v456
    %532 = vmatpush.msra.mxu0 %v448
    %533 = vmatpush.msra.mxu0 %v440
    %534 = vmatpush.msra.mxu0 %v432
    %535 = vmatpush.msra.mxu0 %v424
    %536 = vmatpush.msra.mxu0 %v416
    %537 = vmatmul.f32.gmra.mxu0 %v479
    %v538 = vpop.f32.mrf.mxu0
    %v539 = vadd.f32 0.0, %v538
    %540 = vdwg.mxu0
    %541 = vmatpush.msra.mxu0 0.0
    %542 = vmatpush.msra.mxu0 0.0
    %543 = vmatpush.msra.mxu0 0.0
    %544 = vmatpush.msra.mxu0 0.0
    %545 = vmatpush.msra.mxu0 0.0
    %546 = vmatpush.msra.mxu0 0.0
    %547 = vmatpush.msra.mxu0 0.0
    %548 = vmatpush.msra.mxu0 0.0
    %549 = vmatpush.msra.mxu0 %v473
    %550 = vmatpush.msra.mxu0 %v465
    %551 = vmatpush.msra.mxu0 %v457
    %552 = vmatpush.msra.mxu0 %v449
    %553 = vmatpush.msra.mxu0 %v441
    %554 = vmatpush.msra.mxu0 %v433
    %555 = vmatpush.msra.mxu0 %v425
    %556 = vmatpush.msra.mxu0 %v417
    %557 = vmatmul.f32.gmra.mxu0 %v479
    %v558 = vpop.f32.mrf.mxu0
    %v559 = vadd.f32 0.0, %v558
    %560 = vdwg.mxu0
    %561 = vmatpush.msra.mxu0 0.0
    %562 = vmatpush.msra.mxu0 0.0
    %563 = vmatpush.msra.mxu0 0.0
    %564 = vmatpush.msra.mxu0 0.0
    %565 = vmatpush.msra.mxu0 0.0
    %566 = vmatpush.msra.mxu0 0.0
    %567 = vmatpush.msra.mxu0 0.0
    %568 = vmatpush.msra.mxu0 0.0
    %569 = vmatpush.msra.mxu0 %v474
    %570 = vmatpush.msra.mxu0 %v466
    %571 = vmatpush.msra.mxu0 %v458
    %572 = vmatpush.msra.mxu0 %v450
    %573 = vmatpush.msra.mxu0 %v442
    %574 = vmatpush.msra.mxu0 %v434
    %575 = vmatpush.msra.mxu0 %v426
    %576 = vmatpush.msra.mxu0 %v418
    %577 = vmatmul.f32.gmra.mxu0 %v479
    %v578 = vpop.f32.mrf.mxu0
    %v579 = vadd.f32 0.0, %v578
    %580 = vdwg.mxu0
    %581 = vmatpush.msra.mxu0 0.0
    %582 = vmatpush.msra.mxu0 0.0
    %583 = vmatpush.msra.mxu0 0.0
    %584 = vmatpush.msra.mxu0 0.0
    %585 = vmatpush.msra.mxu0 0.0
    %586 = vmatpush.msra.mxu0 0.0
    %587 = vmatpush.msra.mxu0 0.0
    %588 = vmatpush.msra.mxu0 0.0
    %589 = vmatpush.msra.mxu0 %v475
    %590 = vmatpush.msra.mxu0 %v467
    %591 = vmatpush.msra.mxu0 %v459
    %592 = vmatpush.msra.mxu0 %v451
    %593 = vmatpush.msra.mxu0 %v443
    %594 = vmatpush.msra.mxu0 %v435
    %595 = vmatpush.msra.mxu0 %v427
    %596 = vmatpush.msra.mxu0 %v419
    %597 = vmatmul.f32.gmra.mxu0 %v479
    %v598 = vpop.f32.mrf.mxu0
    %v599 = vadd.f32 0.0, %v598
    %600 = vdwg.mxu0
    %601 = vmatpush.msra.mxu0 0.0
    %602 = vmatpush.msra.mxu0 0.0
    %603 = vmatpush.msra.mxu0 0.0
    %604 = vmatpush.msra.mxu0 0.0
    %605 = vmatpush.msra.mxu0 0.0
    %606 = vmatpush.msra.mxu0 0.0
    %607 = vmatpush.msra.mxu0 0.0
    %608 = vmatpush.msra.mxu0 0.0
    %609 = vmatpush.msra.mxu0 %v476
    %610 = vmatpush.msra.mxu0 %v468
    %611 = vmatpush.msra.mxu0 %v460
    %612 = vmatpush.msra.mxu0 %v452
    %613 = vmatpush.msra.mxu0 %v444
    %614 = vmatpush.msra.mxu0 %v436
    %615 = vmatpush.msra.mxu0 %v428
    %616 = vmatpush.msra.mxu0 %v420
    %617 = vmatmul.f32.gmra.mxu0 %v479
    %v618 = vpop.f32.mrf.mxu0
    %v619 = vadd.f32 0.0, %v618
    %620 = vdwg.mxu0
    %621 = vmatpush.msra.mxu0 0.0
    %622 = vmatpush.msra.mxu0 0.0
    %623 = vmatpush.msra.mxu0 0.0
    %624 = vmatpush.msra.mxu0 0.0
    %625 = vmatpush.msra.mxu0 0.0
    %626 = vmatpush.msra.mxu0 0.0
    %627 = vmatpush.msra.mxu0 0.0
    %628 = vmatpush.msra.mxu0 0.0
    %629 = vmatpush.msra.mxu0 %v477
    %630 = vmatpush.msra.mxu0 %v469
    %631 = vmatpush.msra.mxu0 %v461
    %632 = vmatpush.msra.mxu0 %v453
    %633 = vmatpush.msra.mxu0 %v445
    %634 = vmatpush.msra.mxu0 %v437
    %635 = vmatpush.msra.mxu0 %v429
    %636 = vmatpush.msra.mxu0 %v421
    %637 = vmatmul.f32.gmra.mxu0 %v479
    %v638 = vpop.f32.mrf.mxu0
    %v639 = vadd.f32 0.0, %v638
    %640 = vdwg.mxu0
    %v649 = vrot.slane %v519, 6
    %v650 = vrot.slane %v539, 4
    %v651 = vrot.slane %v559, 2
    %v652 = vrot.slane %v599, 6
    %v653 = vrot.slane %v619, 4
    %v654 = vrot.slane %v639, 2
    %vm655 = vcmask 1041408
    %v656 = vsel %vm655, %v499, %v649
    %vm657 = vcmask 1045508
    %v658 = vsel %vm657, %v650, %v651
    %v659 = vsel %vm371, %v656, %v658
    %v660 = vsel %vm655, %v579, %v652
    %v661 = vsel %vm657, %v653, %v654
    %v662 = vsel %vm371, %v660, %v661
    %v665 = vmul.f32 %v21, %v659
    %v666 = vmul.f32 %v22, %v662
    %667 = vst [vmem:[#allocation2] sm:$0xff] %v665
    %668 = vst [vmem:[#allocation2 + $0x8] sm:$0xff] %v666
    // Predicated region
    $region22: #{tpu_custom_call.1} parent=1 // pred_check
      _
    $region23: #{tpu_custom_call.1} parent=1 // pred_check_branch
      %670 = sbr.rel (0) target = $region25
    $region24: #{tpu_custom_call.1} parent=1 // pred_region
      %672 = vsyncadd [#allocation3], 0
      %s674 = sshll.u32 [#allocation2], 4
      %s675 = int_to_ptr.vmem [resolvable:$true] %s674
      %s676 = sshll.u32 %s5, 4
      %s677 = int_to_ptr.hbm [resolvable:$true] %s676
      %679 = dma.vmem_to_hbm [thread:$0]  %s675, 256, %s677, [#allocation3]
    $region25: #{tpu_custom_call.1} parent=1 // pred_fallthru
      _
    // Predicated region
    $region26: #{tpu_custom_call.1} parent=1 // pred_check
      _
    $region27: #{tpu_custom_call.1} parent=1 // pred_check_branch
      %681 = sbr.rel (0) target = $region29
    $region28: #{tpu_custom_call.1} parent=1 // pred_region
      %683 = dma.done [#allocation3], 256
    $region29: #{tpu_custom_call.1} parent=1 // pred_fallthru
      _
    %684 = vsyncpa [#allocation3], 1

</llo_original>
